<compile_context>
chip_gen: v5e
topology: v5e:2x2
jax: 0.10.0
libtpu: 0.0.40
codegen_flags: <defaults>
</compile_context>

<pallas_src>
import jax
import jax.numpy as jnp
from jax.experimental import pallas as pl
from jax.experimental.pallas import tpu as pltpu

# ---- problem sizes (small, consistent with an RNN validation forward) ----
N_STEPS = 4      # wrapper loop dimension (x_inp.shape[0])
BATCH   = 8
SEQ     = 8
IN_F    = 32
HID     = 32
OUT_F   = 32


def wrapper_for_attribution(x, w_ih, w_hh, b_h, w_out, b_out):
    """x: (n_steps, batch, seq, in_f) -> (n_steps, batch, out_f)."""
    n_steps, batch, seq, in_f = x.shape
    hid = w_hh.shape[0]
    out_f = w_out.shape[1]
    bf = n_steps * batch          # fused "wrapper-step x batch" rows
    rows = bf * seq               # all (n, b, s) rows for the hoisted projection

    # `.float()` of the torch wrapper + a FREE contiguous reshape (no transpose
    # HLO, no extra HBM round trip).  Row ordering is (n, b, s), s fastest.
    x2 = x.astype(jnp.float32).reshape(rows, in_f)

    def kernel(x_ref, wih_ref, whh_ref, bh_ref, wout_ref, bout_ref, o_ref, xw_ref):
        # Hoisted input projection for all wrapper-steps/batch/timesteps at
        # once: one (rows, in_f) x (in_f, hid) MXU matmul + one bias broadcast,
        # staged straight into VMEM scratch (keeps vregs free for the loop).
        xw_ref[...] = (
            jnp.dot(x_ref[...], wih_ref[...], preferred_element_type=jnp.float32)
            + bh_ref[...]
        )

        w_hh = whh_ref[...]
        h = jnp.zeros((bf, hid), dtype=jnp.float32)
        # seq is small & static -> unrolled straight-line body.  Per step:
        # one sublane-strided vld of this timestep's rows (rows t, t+seq, ...)
        # + one (bf,hid)x(hid,hid) matmul (MXU) + add (VPU) + tanh (EUP).
        for t in range(seq):
            xw_t = xw_ref[pl.ds(t, bf, stride=seq), :]
            h = jnp.tanh(xw_t + jnp.dot(h, w_hh, preferred_element_type=jnp.float32))

        out = jnp.dot(h, wout_ref[...], preferred_element_type=jnp.float32) + bout_ref[...]
        o_ref[...] = out.astype(o_ref.dtype)   # single fused store

    vmem = pl.BlockSpec(memory_space=pltpu.MemorySpace.VMEM)
    out = pl.pallas_call(
        kernel,
        out_shape=jax.ShapeDtypeStruct((bf, out_f), jnp.float32),
        in_specs=[vmem] * 6,
        out_specs=vmem,
        scratch_shapes=[pltpu.VMEM((rows, hid), jnp.float32)],
    )(x2, w_ih, w_hh, b_h, w_out, b_out)

    return out.reshape(n_steps, batch, out_f)


def _reference(x, w_ih, w_hh, b_h, w_out, b_out):
    """Pure-JAX reference mirroring the torch wrapper's per-step loop."""
    n_steps, batch, seq, _ = x.shape
    hid = w_hh.shape[0]
    outs = []
    for n in range(n_steps):
        xs = x[n].astype(jnp.float32)
        h = jnp.zeros((batch, hid), dtype=jnp.float32)
        for t in range(seq):
            h = jnp.tanh(xs[:, t, :] @ w_ih + h @ w_hh + b_h)
        outs.append((h @ w_out + b_out)[None])
    return jnp.concatenate(outs, axis=0)


if __name__ == "__main__":
    key = jax.random.PRNGKey(0)
    kx, k1, k2, k3, k4, k5 = jax.random.split(key, 6)

    x = jax.random.normal(kx, (N_STEPS, BATCH, SEQ, IN_F), dtype=jnp.float32)

    # deterministic synthetic parameters for the wrapped RNN model
    w_ih  = 0.1 * jax.random.normal(k1, (IN_F, HID), dtype=jnp.float32)
    w_hh  = 0.1 * jax.random.normal(k2, (HID, HID), dtype=jnp.float32)
    b_h   = 0.1 * jax.random.normal(k3, (1, HID), dtype=jnp.float32)
    w_out = 0.1 * jax.random.normal(k4, (HID, OUT_F), dtype=jnp.float32)
    b_out = 0.1 * jax.random.normal(k5, (1, OUT_F), dtype=jnp.float32)

    out = wrapper_for_attribution(x, w_ih, w_hh, b_h, w_out, b_out)
    out = jax.block_until_ready(out)

    ref = _reference(x, w_ih, w_hh, b_h, w_out, b_out)
    assert out.shape == (N_STEPS, BATCH, OUT_F), out.shape
    assert jnp.allclose(out, ref, atol=1e-5, rtol=1e-5), "mismatch vs reference"

    print("KERNEL_OK")
</pallas_src>

<mosaic_0001>
module attributes {stable_mosaic.version = 11 : i64} {
  func.func @kernel(%arg0: memref<256x32xf32, #tpu.memory_space<vmem>>, %arg1: memref<32x32xf32, #tpu.memory_space<vmem>>, %arg2: memref<32x32xf32, #tpu.memory_space<vmem>>, %arg3: memref<1x32xf32, #tpu.memory_space<vmem>>, %arg4: memref<32x32xf32, #tpu.memory_space<vmem>>, %arg5: memref<1x32xf32, #tpu.memory_space<vmem>>, %arg6: memref<32x32xf32, #tpu.memory_space<vmem>>, %arg7: memref<256x32xf32, #tpu.memory_space<vmem>>) attributes {dimension_semantics = [], scalar_prefetch = 0 : i64, scratch_operands = 1 : i64, tpu.core_type = #tpu.core_type<tc>} {
    %c0 = arith.constant 0 : index
    %c0_0 = arith.constant 0 : index
    %0 = vector.load %arg0[%c0, %c0_0] : memref<256x32xf32, #tpu.memory_space<vmem>>, vector<256x32xf32>
    %c0_1 = arith.constant 0 : index
    %c0_2 = arith.constant 0 : index
    %1 = vector.load %arg1[%c0_1, %c0_2] : memref<32x32xf32, #tpu.memory_space<vmem>>, vector<32x32xf32>
    %cst = arith.constant dense<0.000000e+00> : vector<256x32xf32>
    %2 = tpu.matmul %0, %1, %cst {dimension_numbers = #tpu.dot_dimension_numbers<[1], [0], [0], [1], [0, 0, 1, 1], [], []>} : vector<256x32xf32>, vector<32x32xf32>, vector<256x32xf32> -> vector<256x32xf32>
    %c0_3 = arith.constant 0 : index
    %c0_4 = arith.constant 0 : index
    %3 = vector.load %arg3[%c0_3, %c0_4] : memref<1x32xf32, #tpu.memory_space<vmem>>, vector<1x32xf32>
    %4 = vector.broadcast %3 : vector<1x32xf32> to vector<256x32xf32>
    %5 = arith.addf %2, %4 : vector<256x32xf32>
    %c0_5 = arith.constant 0 : index
    %c0_6 = arith.constant 0 : index
    %6 = vector.load %arg7[%c0_5, %c0_6] : memref<256x32xf32, #tpu.memory_space<vmem>>, vector<256x32xf32>
    tpu.vector_store %arg7[%c0_5, %c0_6], %5 {strides = array<i32>} : memref<256x32xf32, #tpu.memory_space<vmem>>, vector<256x32xf32>,
    %c0_7 = arith.constant 0 : index
    %c0_8 = arith.constant 0 : index
    %7 = vector.load %arg2[%c0_7, %c0_8] : memref<32x32xf32, #tpu.memory_space<vmem>>, vector<32x32xf32>
    %cst_9 = arith.constant 0.000000e+00 : f32
    %8 = vector.broadcast %cst_9 : f32 to vector<32x32xf32>
    %c0_10 = arith.constant 0 : index
    %c0_11 = arith.constant 0 : index
    %9 = tpu.strided_load %arg7[%c0_10, %c0_11] {strides = array<i32: 8, 1>} : memref<256x32xf32, #tpu.memory_space<vmem>>, vector<32x32xf32>
    %cst_12 = arith.constant dense<0.000000e+00> : vector<32x32xf32>
    %10 = tpu.matmul %8, %7, %cst_12 {dimension_numbers = #tpu.dot_dimension_numbers<[1], [0], [0], [1], [0, 0, 1, 1], [], []>} : vector<32x32xf32>, vector<32x32xf32>, vector<32x32xf32> -> vector<32x32xf32>
    %11 = arith.addf %9, %10 : vector<32x32xf32>
    %12 = math.tanh %11 : vector<32x32xf32>
    %c1 = arith.constant 1 : index
    %c0_13 = arith.constant 0 : index
    %13 = tpu.strided_load %arg7[%c1, %c0_13] {strides = array<i32: 8, 1>} : memref<256x32xf32, #tpu.memory_space<vmem>>, vector<32x32xf32>
    %cst_14 = arith.constant dense<0.000000e+00> : vector<32x32xf32>
    %14 = tpu.matmul %12, %7, %cst_14 {dimension_numbers = #tpu.dot_dimension_numbers<[1], [0], [0], [1], [0, 0, 1, 1], [], []>} : vector<32x32xf32>, vector<32x32xf32>, vector<32x32xf32> -> vector<32x32xf32>
    %15 = arith.addf %13, %14 : vector<32x32xf32>
    %16 = math.tanh %15 : vector<32x32xf32>
    %c2 = arith.constant 2 : index
    %c0_15 = arith.constant 0 : index
    %17 = tpu.strided_load %arg7[%c2, %c0_15] {strides = array<i32: 8, 1>} : memref<256x32xf32, #tpu.memory_space<vmem>>, vector<32x32xf32>
    %cst_16 = arith.constant dense<0.000000e+00> : vector<32x32xf32>
    %18 = tpu.matmul %16, %7, %cst_16 {dimension_numbers = #tpu.dot_dimension_numbers<[1], [0], [0], [1], [0, 0, 1, 1], [], []>} : vector<32x32xf32>, vector<32x32xf32>, vector<32x32xf32> -> vector<32x32xf32>
    %19 = arith.addf %17, %18 : vector<32x32xf32>
    %20 = math.tanh %19 : vector<32x32xf32>
    %c3 = arith.constant 3 : index
    %c0_17 = arith.constant 0 : index
    %21 = tpu.strided_load %arg7[%c3, %c0_17] {strides = array<i32: 8, 1>} : memref<256x32xf32, #tpu.memory_space<vmem>>, vector<32x32xf32>
    %cst_18 = arith.constant dense<0.000000e+00> : vector<32x32xf32>
    %22 = tpu.matmul %20, %7, %cst_18 {dimension_numbers = #tpu.dot_dimension_numbers<[1], [0], [0], [1], [0, 0, 1, 1], [], []>} : vector<32x32xf32>, vector<32x32xf32>, vector<32x32xf32> -> vector<32x32xf32>
    %23 = arith.addf %21, %22 : vector<32x32xf32>
    %24 = math.tanh %23 : vector<32x32xf32>
    %c4 = arith.constant 4 : index
    %c0_19 = arith.constant 0 : index
    %25 = tpu.strided_load %arg7[%c4, %c0_19] {strides = array<i32: 8, 1>} : memref<256x32xf32, #tpu.memory_space<vmem>>, vector<32x32xf32>
    %cst_20 = arith.constant dense<0.000000e+00> : vector<32x32xf32>
    %26 = tpu.matmul %24, %7, %cst_20 {dimension_numbers = #tpu.dot_dimension_numbers<[1], [0], [0], [1], [0, 0, 1, 1], [], []>} : vector<32x32xf32>, vector<32x32xf32>, vector<32x32xf32> -> vector<32x32xf32>
    %27 = arith.addf %25, %26 : vector<32x32xf32>
    %28 = math.tanh %27 : vector<32x32xf32>
    %c5 = arith.constant 5 : index
    %c0_21 = arith.constant 0 : index
    %29 = tpu.strided_load %arg7[%c5, %c0_21] {strides = array<i32: 8, 1>} : memref<256x32xf32, #tpu.memory_space<vmem>>, vector<32x32xf32>
    %cst_22 = arith.constant dense<0.000000e+00> : vector<32x32xf32>
    %30 = tpu.matmul %28, %7, %cst_22 {dimension_numbers = #tpu.dot_dimension_numbers<[1], [0], [0], [1], [0, 0, 1, 1], [], []>} : vector<32x32xf32>, vector<32x32xf32>, vector<32x32xf32> -> vector<32x32xf32>
    %31 = arith.addf %29, %30 : vector<32x32xf32>
    %32 = math.tanh %31 : vector<32x32xf32>
    %c6 = arith.constant 6 : index
    %c0_23 = arith.constant 0 : index
    %33 = tpu.strided_load %arg7[%c6, %c0_23] {strides = array<i32: 8, 1>} : memref<256x32xf32, #tpu.memory_space<vmem>>, vector<32x32xf32>
    %cst_24 = arith.constant dense<0.000000e+00> : vector<32x32xf32>
    %34 = tpu.matmul %32, %7, %cst_24 {dimension_numbers = #tpu.dot_dimension_numbers<[1], [0], [0], [1], [0, 0, 1, 1], [], []>} : vector<32x32xf32>, vector<32x32xf32>, vector<32x32xf32> -> vector<32x32xf32>
    %35 = arith.addf %33, %34 : vector<32x32xf32>
    %36 = math.tanh %35 : vector<32x32xf32>
    %c7 = arith.constant 7 : index
    %c0_25 = arith.constant 0 : index
    %37 = tpu.strided_load %arg7[%c7, %c0_25] {strides = array<i32: 8, 1>} : memref<256x32xf32, #tpu.memory_space<vmem>>, vector<32x32xf32>
    %cst_26 = arith.constant dense<0.000000e+00> : vector<32x32xf32>
    %38 = tpu.matmul %36, %7, %cst_26 {dimension_numbers = #tpu.dot_dimension_numbers<[1], [0], [0], [1], [0, 0, 1, 1], [], []>} : vector<32x32xf32>, vector<32x32xf32>, vector<32x32xf32> -> vector<32x32xf32>
    %39 = arith.addf %37, %38 : vector<32x32xf32>
    %40 = math.tanh %39 : vector<32x32xf32>
    %c0_27 = arith.constant 0 : index
    %c0_28 = arith.constant 0 : index
    %41 = vector.load %arg4[%c0_27, %c0_28] : memref<32x32xf32, #tpu.memory_space<vmem>>, vector<32x32xf32>
    %cst_29 = arith.constant dense<0.000000e+00> : vector<32x32xf32>
    %42 = tpu.matmul %40, %41, %cst_29 {dimension_numbers = #tpu.dot_dimension_numbers<[1], [0], [0], [1], [0, 0, 1, 1], [], []>} : vector<32x32xf32>, vector<32x32xf32>, vector<32x32xf32> -> vector<32x32xf32>
    %c0_30 = arith.constant 0 : index
    %c0_31 = arith.constant 0 : index
    %43 = vector.load %arg5[%c0_30, %c0_31] : memref<1x32xf32, #tpu.memory_space<vmem>>, vector<1x32xf32>
    %44 = vector.broadcast %43 : vector<1x32xf32> to vector<32x32xf32>
    %45 = arith.addf %42, %44 : vector<32x32xf32>
    %c0_32 = arith.constant 0 : index
    %c0_33 = arith.constant 0 : index
    %46 = vector.load %arg6[%c0_32, %c0_33] : memref<32x32xf32, #tpu.memory_space<vmem>>, vector<32x32xf32>
    tpu.vector_store %arg6[%c0_32, %c0_33], %45 {strides = array<i32>} : memref<32x32xf32, #tpu.memory_space<vmem>>, vector<32x32xf32>,
    return
  }
}

</mosaic_0001>

<llo_original>
// kernel: tpu_custom_call.1
$region0: #{tpu_custom_call.1}
  #allocation0 [shape = 'u32[]', space=smem, size = 0x4, offset = 0x4, fixed_abs, tag = 'smem constant byte address 0x4 - core index']
  #allocation1 [shape = 'u32[72,128]{1,0:T(1,128)}', space=vmem, size = 0x9000, scoped, tag = 'internal scratch']
  #allocation2 [shape = 'f32[256,32]{1,0:T(8,128)}', space=vmem, size = 0x20000, scoped, tag = 'scratch operand']
  %s0 = inlined_call_operand.vmem [shape: f32[256,32], index: 0, kind: input, shape index: {}]
  %s1 = inlined_call_operand.vmem [shape: f32[32,32], index: 1, kind: input, shape index: {}]
  %s2 = inlined_call_operand.vmem [shape: f32[32,32], index: 2, kind: input, shape index: {}]
  %s3 = inlined_call_operand.vmem [shape: f32[1,32], index: 3, kind: input, shape index: {}]
  %s4 = inlined_call_operand.vmem [shape: f32[32,32], index: 4, kind: input, shape index: {}]
  %s5 = inlined_call_operand.vmem [shape: f32[1,32], index: 5, kind: input, shape index: {}]
  %s6 = inlined_call_operand.hbm [shape: f32[32,32], index: 6, kind: output, shape index: {}]
  %s7 = sld [smem:[#allocation0]]
  $region34: #{tpu_custom_call.1} parent=0
    _
  %s9 = ssub.s32 1, %s7
  %s10 = scalar_select 0, %s9, %s7
  $region1: #{tpu_custom_call.1} parent=0
    #allocation3 [shape = 'u8[16384]{0}', space=vmem, size = 0x4000, scoped, tag = 'output window, operand 0, single buffered']
    #allocation4 [shape = 's32[1]{0}', space=sflag, size = 0x4, scoped, tag = 'scoped memory for tpu_custom_call.1']
    %11 = vsyncpa [#allocation4], 0
    // Predicated region
    $region2: #{tpu_custom_call.1} parent=1 // pred_check
      _
    $region3: #{tpu_custom_call.1} parent=1 // pred_check_branch
      %13 = sbr.rel (0) target = $region5
    $region4: #{tpu_custom_call.1} parent=1 // pred_region
      _
    $region5: #{tpu_custom_call.1} parent=1 // pred_fallthru
      _
    // Predicated region
    $region6: #{tpu_custom_call.1} parent=1 // pred_check
      _
    $region7: #{tpu_custom_call.1} parent=1 // pred_check_branch
      %15 = sbr.rel (0) target = $region9
    $region8: #{tpu_custom_call.1} parent=1 // pred_region
      _
    $region9: #{tpu_custom_call.1} parent=1 // pred_fallthru
      _
    // Predicated region
    $region10: #{tpu_custom_call.1} parent=1 // pred_check
      _
    $region11: #{tpu_custom_call.1} parent=1 // pred_check_branch
      %17 = sbr.rel (0) target = $region13
    $region12: #{tpu_custom_call.1} parent=1 // pred_region
      _
    $region13: #{tpu_custom_call.1} parent=1 // pred_fallthru
      _
    // Predicated region
    $region14: #{tpu_custom_call.1} parent=1 // pred_check
      _
    $region15: #{tpu_custom_call.1} parent=1 // pred_check_branch
      %19 = sbr.rel (0) target = $region17
    $region16: #{tpu_custom_call.1} parent=1 // pred_region
      _
    $region17: #{tpu_custom_call.1} parent=1 // pred_fallthru
      _
    // Predicated region
    $region18: #{tpu_custom_call.1} parent=1 // pred_check
      _
    $region19: #{tpu_custom_call.1} parent=1 // pred_check_branch
      %21 = sbr.rel (0) target = $region21
    $region20: #{tpu_custom_call.1} parent=1 // pred_region
      _
    $region21: #{tpu_custom_call.1} parent=1 // pred_fallthru
      _
    // Predicated region
    $region22: #{tpu_custom_call.1} parent=1 // pred_check
      _
    $region23: #{tpu_custom_call.1} parent=1 // pred_check_branch
      %23 = sbr.rel (0) target = $region25
    $region24: #{tpu_custom_call.1} parent=1 // pred_region
      _
    $region25: #{tpu_custom_call.1} parent=1 // pred_fallthru
      _
    %v24 = vld [vmem:[%s0] sm:$0xff]
    %v25 = vld [vmem:[%s0 + $0x8] sm:$0xff]
    %v26 = vld [vmem:[%s0 + $0x10] sm:$0xff]
    %v27 = vld [vmem:[%s0 + $0x18] sm:$0xff]
    %v28 = vld [vmem:[%s0 + $0x20] sm:$0xff]
    %v29 = vld [vmem:[%s0 + $0x28] sm:$0xff]
    %v30 = vld [vmem:[%s0 + $0x30] sm:$0xff]
    %v31 = vld [vmem:[%s0 + $0x38] sm:$0xff]
    %v32 = vld [vmem:[%s0 + $0x40] sm:$0xff]
    %v33 = vld [vmem:[%s0 + $0x48] sm:$0xff]
    %v34 = vld [vmem:[%s0 + $0x50] sm:$0xff]
    %v35 = vld [vmem:[%s0 + $0x58] sm:$0xff]
    %v36 = vld [vmem:[%s0 + $0x60] sm:$0xff]
    %v37 = vld [vmem:[%s0 + $0x68] sm:$0xff]
    %v38 = vld [vmem:[%s0 + $0x70] sm:$0xff]
    %v39 = vld [vmem:[%s0 + $0x78] sm:$0xff]
    %v40 = vld [vmem:[%s0 + $0x80] sm:$0xff]
    %v41 = vld [vmem:[%s0 + $0x88] sm:$0xff]
    %v42 = vld [vmem:[%s0 + $0x90] sm:$0xff]
    %v43 = vld [vmem:[%s0 + $0x98] sm:$0xff]
    %v44 = vld [vmem:[%s0 + $0xa0] sm:$0xff]
    %v45 = vld [vmem:[%s0 + $0xa8] sm:$0xff]
    %v46 = vld [vmem:[%s0 + $0xb0] sm:$0xff]
    %v47 = vld [vmem:[%s0 + $0xb8] sm:$0xff]
    %v48 = vld [vmem:[%s0 + $0xc0] sm:$0xff]
    %v49 = vld [vmem:[%s0 + $0xc8] sm:$0xff]
    %v50 = vld [vmem:[%s0 + $0xd0] sm:$0xff]
    %v51 = vld [vmem:[%s0 + $0xd8] sm:$0xff]
    %v52 = vld [vmem:[%s0 + $0xe0] sm:$0xff]
    %v53 = vld [vmem:[%s0 + $0xe8] sm:$0xff]
    %v54 = vld [vmem:[%s0 + $0xf0] sm:$0xff]
    %v55 = vld [vmem:[%s0 + $0xf8] sm:$0xff]
    %v56 = vld [vmem:[%s1] sm:$0xff]
    %v57 = vld [vmem:[%s1 + $0x8] sm:$0xff]
    %v58 = vld [vmem:[%s1 + $0x10] sm:$0xff]
    %v59 = vld [vmem:[%s1 + $0x18] sm:$0xff]
    %v60 = vld [vmem:[%s3] sm:$0x1]
    %v62 = vperm.slane %v60, 0
    %vm64 = vcmask 261120
    %v66 = vsel %vm64, %v24, 0
    %v69 = vsel %vm64, %v25, 0
    %v72 = vsel %vm64, %v26, 0
    %v75 = vsel %vm64, %v27, 0
    %v78 = vsel %vm64, %v28, 0
    %v81 = vsel %vm64, %v29, 0
    %v84 = vsel %vm64, %v30, 0
    %v87 = vsel %vm64, %v31, 0
    %v90 = vsel %vm64, %v32, 0
    %v93 = vsel %vm64, %v33, 0
    %v96 = vsel %vm64, %v34, 0
    %v99 = vsel %vm64, %v35, 0
    %v102 = vsel %vm64, %v36, 0
    %v105 = vsel %vm64, %v37, 0
    %v108 = vsel %vm64, %v38, 0
    %v111 = vsel %vm64, %v39, 0
    %v114 = vsel %vm64, %v40, 0
    %v117 = vsel %vm64, %v41, 0
    %v120 = vsel %vm64, %v42, 0
    %v123 = vsel %vm64, %v43, 0
    %v126 = vsel %vm64, %v44, 0
    %v129 = vsel %vm64, %v45, 0
    %v132 = vsel %vm64, %v46, 0
    %v135 = vsel %vm64, %v47, 0
    %v138 = vsel %vm64, %v48, 0
    %v141 = vsel %vm64, %v49, 0
    %v144 = vsel %vm64, %v50, 0
    %v147 = vsel %vm64, %v51, 0
    %v150 = vsel %vm64, %v52, 0
    %v153 = vsel %vm64, %v53, 0
    %v156 = vsel %vm64, %v54, 0
    %v159 = vsel %vm64, %v55, 0
    %161 = vmatpush.msra.mxu0 0.0
    %162 = vmatpush.msra.mxu0 0.0
    %163 = vmatpush.msra.mxu0 0.0
    %164 = vmatpush.msra.mxu0 0.0
    %165 = vmatpush.msra.mxu0 0.0
    %166 = vmatpush.msra.mxu0 0.0
    %167 = vmatpush.msra.mxu0 0.0
    %168 = vmatpush.msra.mxu0 0.0
    %169 = vmatpush.msra.mxu0 0.0
    %170 = vmatpush.msra.mxu0 0.0
    %171 = vmatpush.msra.mxu0 0.0
    %172 = vmatpush.msra.mxu0 0.0
    %173 = vmatpush.msra.mxu0 %v59
    %174 = vmatpush.msra.mxu0 %v58
    %175 = vmatpush.msra.mxu0 %v57
    %176 = vmatpush.msra.mxu0 %v56
    %177 = vmatmul.f32.gmra.mxu0 %v66
    %v178 = vpop.f32.mrf.mxu0
    %v179 = vadd.f32 %v62, %v178
    %180 = vmatmul.f32.gmra.mxu0 %v69
    %v181 = vpop.f32.mrf.mxu0
    %v182 = vadd.f32 %v62, %v181
    %183 = vmatmul.f32.gmra.mxu0 %v72
    %v184 = vpop.f32.mrf.mxu0
    %v185 = vadd.f32 %v62, %v184
    %186 = vmatmul.f32.gmra.mxu0 %v75
    %v187 = vpop.f32.mrf.mxu0
    %v188 = vadd.f32 %v62, %v187
    %189 = vmatmul.f32.gmra.mxu0 %v78
    %v190 = vpop.f32.mrf.mxu0
    %v191 = vadd.f32 %v62, %v190
    %192 = vmatmul.f32.gmra.mxu0 %v81
    %v193 = vpop.f32.mrf.mxu0
    %v194 = vadd.f32 %v62, %v193
    %195 = vmatmul.f32.gmra.mxu0 %v84
    %v196 = vpop.f32.mrf.mxu0
    %v197 = vadd.f32 %v62, %v196
    %198 = vmatmul.f32.gmra.mxu0 %v87
    %v199 = vpop.f32.mrf.mxu0
    %v200 = vadd.f32 %v62, %v199
    %201 = vmatmul.f32.gmra.mxu0 %v90
    %v202 = vpop.f32.mrf.mxu0
    %v203 = vadd.f32 %v62, %v202
    %204 = vmatmul.f32.gmra.mxu0 %v93
    %v205 = vpop.f32.mrf.mxu0
    %v206 = vadd.f32 %v62, %v205
    %207 = vmatmul.f32.gmra.mxu0 %v96
    %v208 = vpop.f32.mrf.mxu0
    %v209 = vadd.f32 %v62, %v208
    %210 = vmatmul.f32.gmra.mxu0 %v99
    %v211 = vpop.f32.mrf.mxu0
    %v212 = vadd.f32 %v62, %v211
    %213 = vmatmul.f32.gmra.mxu0 %v102
    %v214 = vpop.f32.mrf.mxu0
    %v215 = vadd.f32 %v62, %v214
    %216 = vmatmul.f32.gmra.mxu0 %v105
    %v217 = vpop.f32.mrf.mxu0
    %v218 = vadd.f32 %v62, %v217
    %219 = vmatmul.f32.gmra.mxu0 %v108
    %v220 = vpop.f32.mrf.mxu0
    %v221 = vadd.f32 %v62, %v220
    %222 = vmatmul.f32.gmra.mxu0 %v111
    %v223 = vpop.f32.mrf.mxu0
    %v224 = vadd.f32 %v62, %v223
    %225 = vmatmul.f32.gmra.mxu0 %v114
    %v226 = vpop.f32.mrf.mxu0
    %v227 = vadd.f32 %v62, %v226
    %228 = vmatmul.f32.gmra.mxu0 %v117
    %v229 = vpop.f32.mrf.mxu0
    %v230 = vadd.f32 %v62, %v229
    %231 = vmatmul.f32.gmra.mxu0 %v120
    %v232 = vpop.f32.mrf.mxu0
    %v233 = vadd.f32 %v62, %v232
    %234 = vmatmul.f32.gmra.mxu0 %v123
    %v235 = vpop.f32.mrf.mxu0
    %v236 = vadd.f32 %v62, %v235
    %237 = vmatmul.f32.gmra.mxu0 %v126
    %v238 = vpop.f32.mrf.mxu0
    %v239 = vadd.f32 %v62, %v238
    %240 = vmatmul.f32.gmra.mxu0 %v129
    %v241 = vpop.f32.mrf.mxu0
    %v242 = vadd.f32 %v62, %v241
    %243 = vmatmul.f32.gmra.mxu0 %v132
    %v244 = vpop.f32.mrf.mxu0
    %v245 = vadd.f32 %v62, %v244
    %246 = vmatmul.f32.gmra.mxu0 %v135
    %v247 = vpop.f32.mrf.mxu0
    %v248 = vadd.f32 %v62, %v247
    %249 = vmatmul.f32.gmra.mxu0 %v138
    %v250 = vpop.f32.mrf.mxu0
    %v251 = vadd.f32 %v62, %v250
    %252 = vmatmul.f32.gmra.mxu0 %v141
    %v253 = vpop.f32.mrf.mxu0
    %v254 = vadd.f32 %v62, %v253
    %255 = vmatmul.f32.gmra.mxu0 %v144
    %v256 = vpop.f32.mrf.mxu0
    %v257 = vadd.f32 %v62, %v256
    %258 = vmatmul.f32.gmra.mxu0 %v147
    %v259 = vpop.f32.mrf.mxu0
    %v260 = vadd.f32 %v62, %v259
    %261 = vmatmul.f32.gmra.mxu0 %v150
    %v262 = vpop.f32.mrf.mxu0
    %v263 = vadd.f32 %v62, %v262
    %264 = vmatmul.f32.gmra.mxu0 %v153
    %v265 = vpop.f32.mrf.mxu0
    %v266 = vadd.f32 %v62, %v265
    %267 = vmatmul.f32.gmra.mxu0 %v156
    %v268 = vpop.f32.mrf.mxu0
    %v269 = vadd.f32 %v62, %v268
    %270 = vmatmul.f32.gmra.mxu0 %v159
    %v271 = vpop.f32.mrf.mxu0
    %v272 = vadd.f32 %v62, %v271
    %273 = vdwg.mxu0
    %274 = vst.msk [vmem:[#allocation2] sm:$0xff] %vm64, %v179
    %275 = vst.msk [vmem:[#allocation2 + $0x8] sm:$0xff] %vm64, %v182
    %276 = vst.msk [vmem:[#allocation2 + $0x10] sm:$0xff] %vm64, %v185
    %277 = vst.msk [vmem:[#allocation2 + $0x18] sm:$0xff] %vm64, %v188
    %278 = vst.msk [vmem:[#allocation2 + $0x20] sm:$0xff] %vm64, %v191
    %279 = vst.msk [vmem:[#allocation2 + $0x28] sm:$0xff] %vm64, %v194
    %280 = vst.msk [vmem:[#allocation2 + $0x30] sm:$0xff] %vm64, %v197
    %281 = vst.msk [vmem:[#allocation2 + $0x38] sm:$0xff] %vm64, %v200
    %282 = vst.msk [vmem:[#allocation2 + $0x40] sm:$0xff] %vm64, %v203
    %283 = vst.msk [vmem:[#allocation2 + $0x48] sm:$0xff] %vm64, %v206
    %284 = vst.msk [vmem:[#allocation2 + $0x50] sm:$0xff] %vm64, %v209
    %285 = vst.msk [vmem:[#allocation2 + $0x58] sm:$0xff] %vm64, %v212
    %286 = vst.msk [vmem:[#allocation2 + $0x60] sm:$0xff] %vm64, %v215
    %287 = vst.msk [vmem:[#allocation2 + $0x68] sm:$0xff] %vm64, %v218
    %288 = vst.msk [vmem:[#allocation2 + $0x70] sm:$0xff] %vm64, %v221
    %289 = vst.msk [vmem:[#allocation2 + $0x78] sm:$0xff] %vm64, %v224
    %290 = vst.msk [vmem:[#allocation2 + $0x80] sm:$0xff] %vm64, %v227
    %291 = vst.msk [vmem:[#allocation2 + $0x88] sm:$0xff] %vm64, %v230
    %292 = vst.msk [vmem:[#allocation2 + $0x90] sm:$0xff] %vm64, %v233
    %293 = vst.msk [vmem:[#allocation2 + $0x98] sm:$0xff] %vm64, %v236
    %294 = vst.msk [vmem:[#allocation2 + $0xa0] sm:$0xff] %vm64, %v239
    %295 = vst.msk [vmem:[#allocation2 + $0xa8] sm:$0xff] %vm64, %v242
    %296 = vst.msk [vmem:[#allocation2 + $0xb0] sm:$0xff] %vm64, %v245
    %297 = vst.msk [vmem:[#allocation2 + $0xb8] sm:$0xff] %vm64, %v248
    %298 = vst.msk [vmem:[#allocation2 + $0xc0] sm:$0xff] %vm64, %v251
    %299 = vst.msk [vmem:[#allocation2 + $0xc8] sm:$0xff] %vm64, %v254
    %300 = vst.msk [vmem:[#allocation2 + $0xd0] sm:$0xff] %vm64, %v257
    %301 = vst.msk [vmem:[#allocation2 + $0xd8] sm:$0xff] %vm64, %v260
    %302 = vst.msk [vmem:[#allocation2 + $0xe0] sm:$0xff] %vm64, %v263
    %303 = vst.msk [vmem:[#allocation2 + $0xe8] sm:$0xff] %vm64, %v266
    %304 = vst.msk [vmem:[#allocation2 + $0xf0] sm:$0xff] %vm64, %v269
    %305 = vst.msk [vmem:[#allocation2 + $0xf8] sm:$0xff] %vm64, %v272
    %v306 = vld [vmem:[%s2] sm:$0xff]
    %v307 = vld [vmem:[%s2 + $0x8] sm:$0xff]
    %v308 = vld [vmem:[%s2 + $0x10] sm:$0xff]
    %v309 = vld [vmem:[%s2 + $0x18] sm:$0xff]
    %v310 = vld [vmem:[#allocation2] ss:$8 sm:$0xf]
    %v311 = vld [vmem:[#allocation2] ss:$8 sm:$0xf0]
    %v312 = vor.u32 %v310, %v311
    %s313 = scalar_lea.vmem [#allocation2], 64
    %v314 = vld [vmem:[%s313] ss:$8 sm:$0xf]
    %v315 = vld [vmem:[%s313] ss:$8 sm:$0xf0]
    %v316 = vor.u32 %v314, %v315
    %s317 = scalar_lea.vmem [#allocation2], 128
    %v318 = vld [vmem:[%s317] ss:$8 sm:$0xf]
    %v319 = vld [vmem:[%s317] ss:$8 sm:$0xf0]
    %v320 = vor.u32 %v318, %v319
    %s321 = scalar_lea.vmem [#allocation2], 192
    %v322 = vld [vmem:[%s321] ss:$8 sm:$0xf]
    %v323 = vld [vmem:[%s321] ss:$8 sm:$0xf0]
    %v324 = vor.u32 %v322, %v323
    %v326 = vsel %vm64, 0.0, 0
    %328 = vmatpush.msra.mxu0 0.0
    %329 = vmatpush.msra.mxu0 0.0
    %330 = vmatpush.msra.mxu0 0.0
    %331 = vmatpush.msra.mxu0 0.0
    %332 = vmatpush.msra.mxu0 0.0
    %333 = vmatpush.msra.mxu0 0.0
    %334 = vmatpush.msra.mxu0 0.0
    %335 = vmatpush.msra.mxu0 0.0
    %336 = vmatpush.msra.mxu0 0.0
    %337 = vmatpush.msra.mxu0 0.0
    %338 = vmatpush.msra.mxu0 0.0
    %339 = vmatpush.msra.mxu0 0.0
    %340 = vmatpush.msra.mxu0 %v309
    %341 = vmatpush.msra.mxu0 %v308
    %342 = vmatpush.msra.mxu0 %v307
    %343 = vmatpush.msra.mxu0 %v306
    %344 = vmatmul.f32.gmra.mxu0 %v326
    %v345 = vpop.f32.mrf.mxu0
    %v346 = vadd.f32 0.0, %v345
    %347 = vmatmul.f32.gmra.mxu0 %v326
    %v348 = vpop.f32.mrf.mxu0
    %v349 = vadd.f32 0.0, %v348
    %350 = vmatmul.f32.gmra.mxu0 %v326
    %v351 = vpop.f32.mrf.mxu0
    %v352 = vadd.f32 0.0, %v351
    %353 = vmatmul.f32.gmra.mxu0 %v326
    %v354 = vpop.f32.mrf.mxu0
    %v355 = vadd.f32 0.0, %v354
    %356 = vdwg.mxu0
    %v357 = vadd.f32 %v312, %v346
    %v358 = vadd.f32 %v316, %v349
    %v359 = vadd.f32 %v320, %v352
    %v360 = vadd.f32 %v324, %v355
    %v361 = vtanh.pop %v357
    %v362 = vtanh.pop %v358
    %v363 = vtanh.pop %v359
    %v364 = vtanh.pop %v360
    %s365 = scalar_lea.vmem [#allocation2], 1
    %v366 = vld [vmem:[%s365] ss:$8 sm:$0xf]
    %v367 = vld [vmem:[%s365] ss:$8 sm:$0xf0]
    %v368 = vor.u32 %v366, %v367
    %s369 = scalar_lea.vmem [#allocation2], 65
    %v370 = vld [vmem:[%s369] ss:$8 sm:$0xf]
    %v371 = vld [vmem:[%s369] ss:$8 sm:$0xf0]
    %v372 = vor.u32 %v370, %v371
    %s373 = scalar_lea.vmem [#allocation2], 129
    %v374 = vld [vmem:[%s373] ss:$8 sm:$0xf]
    %v375 = vld [vmem:[%s373] ss:$8 sm:$0xf0]
    %v376 = vor.u32 %v374, %v375
    %s377 = scalar_lea.vmem [#allocation2], 193
    %v378 = vld [vmem:[%s377] ss:$8 sm:$0xf]
    %v379 = vld [vmem:[%s377] ss:$8 sm:$0xf0]
    %v380 = vor.u32 %v378, %v379
    %v382 = vsel %vm64, %v361, 0
    %v385 = vsel %vm64, %v362, 0
    %v388 = vsel %vm64, %v363, 0
    %v391 = vsel %vm64, %v364, 0
    %393 = vmatpush.msra.mxu0 0.0
    %394 = vmatpush.msra.mxu0 0.0
    %395 = vmatpush.msra.mxu0 0.0
    %396 = vmatpush.msra.mxu0 0.0
    %397 = vmatpush.msra.mxu0 0.0
    %398 = vmatpush.msra.mxu0 0.0
    %399 = vmatpush.msra.mxu0 0.0
    %400 = vmatpush.msra.mxu0 0.0
    %401 = vmatpush.msra.mxu0 0.0
    %402 = vmatpush.msra.mxu0 0.0
    %403 = vmatpush.msra.mxu0 0.0
    %404 = vmatpush.msra.mxu0 0.0
    %405 = vmatpush.msra.mxu0 %v309
    %406 = vmatpush.msra.mxu0 %v308
    %407 = vmatpush.msra.mxu0 %v307
    %408 = vmatpush.msra.mxu0 %v306
    %409 = vmatmul.f32.gmra.mxu0 %v382
    %v410 = vpop.f32.mrf.mxu0
    %v411 = vadd.f32 0.0, %v410
    %412 = vmatmul.f32.gmra.mxu0 %v385
    %v413 = vpop.f32.mrf.mxu0
    %v414 = vadd.f32 0.0, %v413
    %415 = vmatmul.f32.gmra.mxu0 %v388
    %v416 = vpop.f32.mrf.mxu0
    %v417 = vadd.f32 0.0, %v416
    %418 = vmatmul.f32.gmra.mxu0 %v391
    %v419 = vpop.f32.mrf.mxu0
    %v420 = vadd.f32 0.0, %v419
    %421 = vdwg.mxu0
    %v422 = vadd.f32 %v368, %v411
    %v423 = vadd.f32 %v372, %v414
    %v424 = vadd.f32 %v376, %v417
    %v425 = vadd.f32 %v380, %v420
    %v426 = vtanh.pop %v422
    %v427 = vtanh.pop %v423
    %v428 = vtanh.pop %v424
    %v429 = vtanh.pop %v425
    %s430 = scalar_lea.vmem [#allocation2], 2
    %v431 = vld [vmem:[%s430] ss:$8 sm:$0xf]
    %v432 = vld [vmem:[%s430] ss:$8 sm:$0xf0]
    %v433 = vor.u32 %v431, %v432
    %s434 = scalar_lea.vmem [#allocation2], 66
    %v435 = vld [vmem:[%s434] ss:$8 sm:$0xf]
    %v436 = vld [vmem:[%s434] ss:$8 sm:$0xf0]
    %v437 = vor.u32 %v435, %v436
    %s438 = scalar_lea.vmem [#allocation2], 130
    %v439 = vld [vmem:[%s438] ss:$8 sm:$0xf]
    %v440 = vld [vmem:[%s438] ss:$8 sm:$0xf0]
    %v441 = vor.u32 %v439, %v440
    %s442 = scalar_lea.vmem [#allocation2], 194
    %v443 = vld [vmem:[%s442] ss:$8 sm:$0xf]
    %v444 = vld [vmem:[%s442] ss:$8 sm:$0xf0]
    %v445 = vor.u32 %v443, %v444
    %v447 = vsel %vm64, %v426, 0
    %v450 = vsel %vm64, %v427, 0
    %v453 = vsel %vm64, %v428, 0
    %v456 = vsel %vm64, %v429, 0
    %458 = vmatpush.msra.mxu0 0.0
    %459 = vmatpush.msra.mxu0 0.0
    %460 = vmatpush.msra.mxu0 0.0
    %461 = vmatpush.msra.mxu0 0.0
    %462 = vmatpush.msra.mxu0 0.0
    %463 = vmatpush.msra.mxu0 0.0
    %464 = vmatpush.msra.mxu0 0.0
    %465 = vmatpush.msra.mxu0 0.0
    %466 = vmatpush.msra.mxu0 0.0
    %467 = vmatpush.msra.mxu0 0.0
    %468 = vmatpush.msra.mxu0 0.0
    %469 = vmatpush.msra.mxu0 0.0
    %470 = vmatpush.msra.mxu0 %v309
    %471 = vmatpush.msra.mxu0 %v308
    %472 = vmatpush.msra.mxu0 %v307
    %473 = vmatpush.msra.mxu0 %v306
    %474 = vmatmul.f32.gmra.mxu0 %v447
    %v475 = vpop.f32.mrf.mxu0
    %v476 = vadd.f32 0.0, %v475
    %477 = vmatmul.f32.gmra.mxu0 %v450
    %v478 = vpop.f32.mrf.mxu0
    %v479 = vadd.f32 0.0, %v478
    %480 = vmatmul.f32.gmra.mxu0 %v453
    %v481 = vpop.f32.mrf.mxu0
    %v482 = vadd.f32 0.0, %v481
    %483 = vmatmul.f32.gmra.mxu0 %v456
    %v484 = vpop.f32.mrf.mxu0
    %v485 = vadd.f32 0.0, %v484
    %486 = vdwg.mxu0
    %v487 = vadd.f32 %v433, %v476
    %v488 = vadd.f32 %v437, %v479
    %v489 = vadd.f32 %v441, %v482
    %v490 = vadd.f32 %v445, %v485
    %v491 = vtanh.pop %v487
    %v492 = vtanh.pop %v488
    %v493 = vtanh.pop %v489
    %v494 = vtanh.pop %v490
    %s495 = scalar_lea.vmem [#allocation2], 3
    %v496 = vld [vmem:[%s495] ss:$8 sm:$0xf]
    %v497 = vld [vmem:[%s495] ss:$8 sm:$0xf0]
    %v498 = vor.u32 %v496, %v497
    %s499 = scalar_lea.vmem [#allocation2], 67
    %v500 = vld [vmem:[%s499] ss:$8 sm:$0xf]
    %v501 = vld [vmem:[%s499] ss:$8 sm:$0xf0]
    %v502 = vor.u32 %v500, %v501
    %s503 = scalar_lea.vmem [#allocation2], 131
    %v504 = vld [vmem:[%s503] ss:$8 sm:$0xf]
    %v505 = vld [vmem:[%s503] ss:$8 sm:$0xf0]
    %v506 = vor.u32 %v504, %v505
    %s507 = scalar_lea.vmem [#allocation2], 195
    %v508 = vld [vmem:[%s507] ss:$8 sm:$0xf]
    %v509 = vld [vmem:[%s507] ss:$8 sm:$0xf0]
    %v510 = vor.u32 %v508, %v509
    %v512 = vsel %vm64, %v491, 0
    %v515 = vsel %vm64, %v492, 0
    %v518 = vsel %vm64, %v493, 0
    %v521 = vsel %vm64, %v494, 0
    %523 = vmatpush.msra.mxu0 0.0
    %524 = vmatpush.msra.mxu0 0.0
    %525 = vmatpush.msra.mxu0 0.0
    %526 = vmatpush.msra.mxu0 0.0
    %527 = vmatpush.msra.mxu0 0.0
    %528 = vmatpush.msra.mxu0 0.0
    %529 = vmatpush.msra.mxu0 0.0
    %530 = vmatpush.msra.mxu0 0.0
    %531 = vmatpush.msra.mxu0 0.0
    %532 = vmatpush.msra.mxu0 0.0
    %533 = vmatpush.msra.mxu0 0.0
    %534 = vmatpush.msra.mxu0 0.0
    %535 = vmatpush.msra.mxu0 %v309
    %536 = vmatpush.msra.mxu0 %v308
    %537 = vmatpush.msra.mxu0 %v307
    %538 = vmatpush.msra.mxu0 %v306
    %539 = vmatmul.f32.gmra.mxu0 %v512
    %v540 = vpop.f32.mrf.mxu0
    %v541 = vadd.f32 0.0, %v540
    %542 = vmatmul.f32.gmra.mxu0 %v515
    %v543 = vpop.f32.mrf.mxu0
    %v544 = vadd.f32 0.0, %v543
    %545 = vmatmul.f32.gmra.mxu0 %v518
    %v546 = vpop.f32.mrf.mxu0
    %v547 = vadd.f32 0.0, %v546
    %548 = vmatmul.f32.gmra.mxu0 %v521
    %v549 = vpop.f32.mrf.mxu0
    %v550 = vadd.f32 0.0, %v549
    %551 = vdwg.mxu0
    %v552 = vadd.f32 %v498, %v541
    %v553 = vadd.f32 %v502, %v544
    %v554 = vadd.f32 %v506, %v547
    %v555 = vadd.f32 %v510, %v550
    %v556 = vtanh.pop %v552
    %v557 = vtanh.pop %v553
    %v558 = vtanh.pop %v554
    %v559 = vtanh.pop %v555
    %s560 = scalar_lea.vmem [#allocation2], 4
    %v561 = vld [vmem:[%s560] ss:$8 sm:$0xf]
    %v562 = vld [vmem:[%s560] ss:$8 sm:$0xf0]
    %v563 = vor.u32 %v561, %v562
    %s564 = scalar_lea.vmem [#allocation2], 68
    %v565 = vld [vmem:[%s564] ss:$8 sm:$0xf]
    %v566 = vld [vmem:[%s564] ss:$8 sm:$0xf0]
    %v567 = vor.u32 %v565, %v566
    %s568 = scalar_lea.vmem [#allocation2], 132
    %v569 = vld [vmem:[%s568] ss:$8 sm:$0xf]
    %v570 = vld [vmem:[%s568] ss:$8 sm:$0xf0]
    %v571 = vor.u32 %v569, %v570
    %s572 = scalar_lea.vmem [#allocation2], 196
    %v573 = vld [vmem:[%s572] ss:$8 sm:$0xf]
    %v574 = vld [vmem:[%s572] ss:$8 sm:$0xf0]
    %v575 = vor.u32 %v573, %v574
    %v577 = vsel %vm64, %v556, 0
    %v580 = vsel %vm64, %v557, 0
    %v583 = vsel %vm64, %v558, 0
    %v586 = vsel %vm64, %v559, 0
    %588 = vmatpush.msra.mxu0 0.0
    %589 = vmatpush.msra.mxu0 0.0
    %590 = vmatpush.msra.mxu0 0.0
    %591 = vmatpush.msra.mxu0 0.0
    %592 = vmatpush.msra.mxu0 0.0
    %593 = vmatpush.msra.mxu0 0.0
    %594 = vmatpush.msra.mxu0 0.0
    %595 = vmatpush.msra.mxu0 0.0
    %596 = vmatpush.msra.mxu0 0.0
    %597 = vmatpush.msra.mxu0 0.0
    %598 = vmatpush.msra.mxu0 0.0
    %599 = vmatpush.msra.mxu0 0.0
    %600 = vmatpush.msra.mxu0 %v309
    %601 = vmatpush.msra.mxu0 %v308
    %602 = vmatpush.msra.mxu0 %v307
    %603 = vmatpush.msra.mxu0 %v306
    %604 = vmatmul.f32.gmra.mxu0 %v577
    %v605 = vpop.f32.mrf.mxu0
    %v606 = vadd.f32 0.0, %v605
    %607 = vmatmul.f32.gmra.mxu0 %v580
    %v608 = vpop.f32.mrf.mxu0
    %v609 = vadd.f32 0.0, %v608
    %610 = vmatmul.f32.gmra.mxu0 %v583
    %v611 = vpop.f32.mrf.mxu0
    %v612 = vadd.f32 0.0, %v611
    %613 = vmatmul.f32.gmra.mxu0 %v586
    %v614 = vpop.f32.mrf.mxu0
    %v615 = vadd.f32 0.0, %v614
    %616 = vdwg.mxu0
    %v617 = vadd.f32 %v563, %v606
    %v618 = vadd.f32 %v567, %v609
    %v619 = vadd.f32 %v571, %v612
    %v620 = vadd.f32 %v575, %v615
    %v621 = vtanh.pop %v617
    %v622 = vtanh.pop %v618
    %v623 = vtanh.pop %v619
    %v624 = vtanh.pop %v620
    %s625 = scalar_lea.vmem [#allocation2], 5
    %v626 = vld [vmem:[%s625] ss:$8 sm:$0xf]
    %v627 = vld [vmem:[%s625] ss:$8 sm:$0xf0]
    %v628 = vor.u32 %v626, %v627
    %s629 = scalar_lea.vmem [#allocation2], 69
    %v630 = vld [vmem:[%s629] ss:$8 sm:$0xf]
    %v631 = vld [vmem:[%s629] ss:$8 sm:$0xf0]
    %v632 = vor.u32 %v630, %v631
    %s633 = scalar_lea.vmem [#allocation2], 133
    %v634 = vld [vmem:[%s633] ss:$8 sm:$0xf]
    %v635 = vld [vmem:[%s633] ss:$8 sm:$0xf0]
    %v636 = vor.u32 %v634, %v635
    %s637 = scalar_lea.vmem [#allocation2], 197
    %v638 = vld [vmem:[%s637] ss:$8 sm:$0xf]
    %v639 = vld [vmem:[%s637] ss:$8 sm:$0xf0]
    %v640 = vor.u32 %v638, %v639
    %v642 = vsel %vm64, %v621, 0
    %v645 = vsel %vm64, %v622, 0
    %v648 = vsel %vm64, %v623, 0
    %v651 = vsel %vm64, %v624, 0
    %653 = vmatpush.msra.mxu0 0.0
    %654 = vmatpush.msra.mxu0 0.0
    %655 = vmatpush.msra.mxu0 0.0
    %656 = vmatpush.msra.mxu0 0.0
    %657 = vmatpush.msra.mxu0 0.0
    %658 = vmatpush.msra.mxu0 0.0
    %659 = vmatpush.msra.mxu0 0.0
    %660 = vmatpush.msra.mxu0 0.0
    %661 = vmatpush.msra.mxu0 0.0
    %662 = vmatpush.msra.mxu0 0.0
    %663 = vmatpush.msra.mxu0 0.0
    %664 = vmatpush.msra.mxu0 0.0
    %665 = vmatpush.msra.mxu0 %v309
    %666 = vmatpush.msra.mxu0 %v308
    %667 = vmatpush.msra.mxu0 %v307
    %668 = vmatpush.msra.mxu0 %v306
    %669 = vmatmul.f32.gmra.mxu0 %v642
    %v670 = vpop.f32.mrf.mxu0
    %v671 = vadd.f32 0.0, %v670
    %672 = vmatmul.f32.gmra.mxu0 %v645
    %v673 = vpop.f32.mrf.mxu0
    %v674 = vadd.f32 0.0, %v673
    %675 = vmatmul.f32.gmra.mxu0 %v648
    %v676 = vpop.f32.mrf.mxu0
    %v677 = vadd.f32 0.0, %v676
    %678 = vmatmul.f32.gmra.mxu0 %v651
    %v679 = vpop.f32.mrf.mxu0
    %v680 = vadd.f32 0.0, %v679
    %681 = vdwg.mxu0
    %v682 = vadd.f32 %v628, %v671
    %v683 = vadd.f32 %v632, %v674
    %v684 = vadd.f32 %v636, %v677
    %v685 = vadd.f32 %v640, %v680
    %v686 = vtanh.pop %v682
    %v687 = vtanh.pop %v683
    %v688 = vtanh.pop %v684
    %v689 = vtanh.pop %v685
    %s690 = scalar_lea.vmem [#allocation2], 6
    %v691 = vld [vmem:[%s690] ss:$8 sm:$0xf]
    %v692 = vld [vmem:[%s690] ss:$8 sm:$0xf0]
    %v693 = vor.u32 %v691, %v692
    %s694 = scalar_lea.vmem [#allocation2], 70
    %v695 = vld [vmem:[%s694] ss:$8 sm:$0xf]
    %v696 = vld [vmem:[%s694] ss:$8 sm:$0xf0]
    %v697 = vor.u32 %v695, %v696
    %s698 = scalar_lea.vmem [#allocation2], 134
    %v699 = vld [vmem:[%s698] ss:$8 sm:$0xf]
    %v700 = vld [vmem:[%s698] ss:$8 sm:$0xf0]
    %v701 = vor.u32 %v699, %v700
    %s702 = scalar_lea.vmem [#allocation2], 198
    %v703 = vld [vmem:[%s702] ss:$8 sm:$0xf]
    %v704 = vld [vmem:[%s702] ss:$8 sm:$0xf0]
    %v705 = vor.u32 %v703, %v704
    %v707 = vsel %vm64, %v686, 0
    %v710 = vsel %vm64, %v687, 0
    %v713 = vsel %vm64, %v688, 0
    %v716 = vsel %vm64, %v689, 0
    %718 = vmatpush.msra.mxu0 0.0
    %719 = vmatpush.msra.mxu0 0.0
    %720 = vmatpush.msra.mxu0 0.0
    %721 = vmatpush.msra.mxu0 0.0
    %722 = vmatpush.msra.mxu0 0.0
    %723 = vmatpush.msra.mxu0 0.0
    %724 = vmatpush.msra.mxu0 0.0
    %725 = vmatpush.msra.mxu0 0.0
    %726 = vmatpush.msra.mxu0 0.0
    %727 = vmatpush.msra.mxu0 0.0
    %728 = vmatpush.msra.mxu0 0.0
    %729 = vmatpush.msra.mxu0 0.0
    %730 = vmatpush.msra.mxu0 %v309
    %731 = vmatpush.msra.mxu0 %v308
    %732 = vmatpush.msra.mxu0 %v307
    %733 = vmatpush.msra.mxu0 %v306
    %734 = vmatmul.f32.gmra.mxu0 %v707
    %v735 = vpop.f32.mrf.mxu0
    %v736 = vadd.f32 0.0, %v735
    %737 = vmatmul.f32.gmra.mxu0 %v710
    %v738 = vpop.f32.mrf.mxu0
    %v739 = vadd.f32 0.0, %v738
    %740 = vmatmul.f32.gmra.mxu0 %v713
    %v741 = vpop.f32.mrf.mxu0
    %v742 = vadd.f32 0.0, %v741
    %743 = vmatmul.f32.gmra.mxu0 %v716
    %v744 = vpop.f32.mrf.mxu0
    %v745 = vadd.f32 0.0, %v744
    %746 = vdwg.mxu0
    %v747 = vadd.f32 %v693, %v736
    %v748 = vadd.f32 %v697, %v739
    %v749 = vadd.f32 %v701, %v742
    %v750 = vadd.f32 %v705, %v745
    %v751 = vtanh.pop %v747
    %v752 = vtanh.pop %v748
    %v753 = vtanh.pop %v749
    %v754 = vtanh.pop %v750
    %s755 = scalar_lea.vmem [#allocation2], 7
    %v756 = vld [vmem:[%s755] ss:$8 sm:$0xf]
    %v757 = vld [vmem:[%s755] ss:$8 sm:$0xf0]
    %v758 = vor.u32 %v756, %v757
    %s759 = scalar_lea.vmem [#allocation2], 71
    %v760 = vld [vmem:[%s759] ss:$8 sm:$0xf]
    %v761 = vld [vmem:[%s759] ss:$8 sm:$0xf0]
    %v762 = vor.u32 %v760, %v761
    %s763 = scalar_lea.vmem [#allocation2], 135
    %v764 = vld [vmem:[%s763] ss:$8 sm:$0xf]
    %v765 = vld [vmem:[%s763] ss:$8 sm:$0xf0]
    %v766 = vor.u32 %v764, %v765
    %s767 = scalar_lea.vmem [#allocation2], 199
    %v768 = vld [vmem:[%s767] ss:$8 sm:$0xf]
    %v769 = vld [vmem:[%s767] ss:$8 sm:$0xf0]
    %v770 = vor.u32 %v768, %v769
    %v772 = vsel %vm64, %v751, 0
    %v775 = vsel %vm64, %v752, 0
    %v778 = vsel %vm64, %v753, 0
    %v781 = vsel %vm64, %v754, 0
    %783 = vmatpush.msra.mxu0 0.0
    %784 = vmatpush.msra.mxu0 0.0
    %785 = vmatpush.msra.mxu0 0.0
    %786 = vmatpush.msra.mxu0 0.0
    %787 = vmatpush.msra.mxu0 0.0
    %788 = vmatpush.msra.mxu0 0.0
    %789 = vmatpush.msra.mxu0 0.0
    %790 = vmatpush.msra.mxu0 0.0
    %791 = vmatpush.msra.mxu0 0.0
    %792 = vmatpush.msra.mxu0 0.0
    %793 = vmatpush.msra.mxu0 0.0
    %794 = vmatpush.msra.mxu0 0.0
    %795 = vmatpush.msra.mxu0 %v309
    %796 = vmatpush.msra.mxu0 %v308
    %797 = vmatpush.msra.mxu0 %v307
    %798 = vmatpush.msra.mxu0 %v306
    %799 = vmatmul.f32.gmra.mxu0 %v772
    %v800 = vpop.f32.mrf.mxu0
    %v801 = vadd.f32 0.0, %v800
    %802 = vmatmul.f32.gmra.mxu0 %v775
    %v803 = vpop.f32.mrf.mxu0
    %v804 = vadd.f32 0.0, %v803
    %805 = vmatmul.f32.gmra.mxu0 %v778
    %v806 = vpop.f32.mrf.mxu0
    %v807 = vadd.f32 0.0, %v806
    %808 = vmatmul.f32.gmra.mxu0 %v781
    %v809 = vpop.f32.mrf.mxu0
    %v810 = vadd.f32 0.0, %v809
    %811 = vdwg.mxu0
    %v812 = vadd.f32 %v758, %v801
    %v813 = vadd.f32 %v762, %v804
    %v814 = vadd.f32 %v766, %v807
    %v815 = vadd.f32 %v770, %v810
    %v816 = vtanh.pop %v812
    %v817 = vtanh.pop %v813
    %v818 = vtanh.pop %v814
    %v819 = vtanh.pop %v815
    %v820 = vld [vmem:[%s4] sm:$0xff]
    %v821 = vld [vmem:[%s4 + $0x8] sm:$0xff]
    %v822 = vld [vmem:[%s4 + $0x10] sm:$0xff]
    %v823 = vld [vmem:[%s4 + $0x18] sm:$0xff]
    %v824 = vld [vmem:[%s5] sm:$0x1]
    %v826 = vperm.slane %v824, 0
    %v829 = vsel %vm64, %v816, 0
    %v832 = vsel %vm64, %v817, 0
    %v835 = vsel %vm64, %v818, 0
    %v838 = vsel %vm64, %v819, 0
    %840 = vmatpush.msra.mxu0 0.0
    %841 = vmatpush.msra.mxu0 0.0
    %842 = vmatpush.msra.mxu0 0.0
    %843 = vmatpush.msra.mxu0 0.0
    %844 = vmatpush.msra.mxu0 0.0
    %845 = vmatpush.msra.mxu0 0.0
    %846 = vmatpush.msra.mxu0 0.0
    %847 = vmatpush.msra.mxu0 0.0
    %848 = vmatpush.msra.mxu0 0.0
    %849 = vmatpush.msra.mxu0 0.0
    %850 = vmatpush.msra.mxu0 0.0
    %851 = vmatpush.msra.mxu0 0.0
    %852 = vmatpush.msra.mxu0 %v823
    %853 = vmatpush.msra.mxu0 %v822
    %854 = vmatpush.msra.mxu0 %v821
    %855 = vmatpush.msra.mxu0 %v820
    %856 = vmatmul.f32.gmra.mxu0 %v829
    %v857 = vpop.f32.mrf.mxu0
    %v858 = vadd.f32 %v826, %v857
    %859 = vmatmul.f32.gmra.mxu0 %v832
    %v860 = vpop.f32.mrf.mxu0
    %v861 = vadd.f32 %v826, %v860
    %862 = vmatmul.f32.gmra.mxu0 %v835
    %v863 = vpop.f32.mrf.mxu0
    %v864 = vadd.f32 %v826, %v863
    %865 = vmatmul.f32.gmra.mxu0 %v838
    %v866 = vpop.f32.mrf.mxu0
    %v867 = vadd.f32 %v826, %v866
    %868 = vdwg.mxu0
    %869 = vst.msk [vmem:[#allocation3] sm:$0xff] %vm64, %v858
    %870 = vst.msk [vmem:[#allocation3 + $0x8] sm:$0xff] %vm64, %v861
    %871 = vst.msk [vmem:[#allocation3 + $0x10] sm:$0xff] %vm64, %v864
    %872 = vst.msk [vmem:[#allocation3 + $0x18] sm:$0xff] %vm64, %v867
    // Predicated region
    $region26: #{tpu_custom_call.1} parent=1 // pred_check
      _
    $region27: #{tpu_custom_call.1} parent=1 // pred_check_branch
      %874 = sbr.rel (0) target = $region29
    $region28: #{tpu_custom_call.1} parent=1 // pred_region
      %876 = vsyncadd [#allocation4], 0
      %s877 = sshll.u32 [#allocation3], 4
      %s878 = int_to_ptr.vmem [resolvable:$true] %s877
      %s879 = sshll.u32 %s6, 4
      %s880 = int_to_ptr.hbm [resolvable:$true] %s879
      %885 = dma.vmem_to_hbm [thread:$0]  %s878, 512, %s880, [#allocation4], 128, 128, 8
    $region29: #{tpu_custom_call.1} parent=1 // pred_fallthru
      _
    // Predicated region
    $region30: #{tpu_custom_call.1} parent=1 // pred_check
      _
    $region31: #{tpu_custom_call.1} parent=1 // pred_check_branch
      %887 = sbr.rel (0) target = $region33
    $region32: #{tpu_custom_call.1} parent=1 // pred_region
      %889 = dma.done [#allocation4], 512
    $region33: #{tpu_custom_call.1} parent=1 // pred_fallthru
      _
    %890 = vsyncpa [#allocation4], 1

</llo_original>
